<compile_context>
chip_gen: v7x
topology: tpu7x:2x2x1
jax: 0.10.0
libtpu: 0.0.40
codegen_flags: <defaults>
</compile_context>

<pallas_src>
import functools

import jax
import jax.numpy as jnp
from jax.experimental import pallas as pl
from jax.experimental.pallas import tpu as pltpu

_LANE = 128
_MIB = 1024 * 1024


def _vmem_capacity_bytes():
    try:
        return int(pltpu.get_tpu_info().vmem_capacity_bytes)
    except Exception:
        return 64 * _MIB  # conservative (v7x-class) fallback


def _round_down_to(x, m):
    return max(m, (x // m) * m)


def _replicated_spec(shape):
    nd = len(shape)
    return pl.BlockSpec(shape, lambda *_: (0,) * nd)


def _maybe_buffered_spec(shape, index_map, bufs):
    """Input spec with an explicit pipeline depth when bufs != 2 (v7x)."""
    if bufs and bufs != 2:
        try:
            return pl.BlockSpec(shape, index_map, pipeline_mode=pl.Buffered(bufs))
        except TypeError:
            pass
    return pl.BlockSpec(shape, index_map)


# ---------------------------------------------------------------------------
# Pass 1: per-(outer, channel-block) partial channel sums over spatial extent
# ---------------------------------------------------------------------------
def _pool_partial_kernel(x0_ref, x1_ref, x2_ref, part_ref, acc_ref,
                         *, hw, tile_hw, n_inner, needs_mask):
    i = pl.program_id(2)

    @pl.when(i == 0)
    def _init():
        acc_ref[...] = jnp.zeros_like(acc_ref)

    xs = (x0_ref[...].astype(jnp.float32)
          + x1_ref[...].astype(jnp.float32)
          + x2_ref[...].astype(jnp.float32))                    # (B, Ct, T)

    if needs_mask:
        # Ragged last spatial tile (or clamped out-of-range slot): zero the
        # lanes that fall outside the real H*W extent before accumulating.
        o = pl.program_id(1)
        start = (o * n_inner + i) * tile_hw
        lane = jax.lax.broadcasted_iota(jnp.int32, xs.shape, 2)
        xs = jnp.where(lane < hw - start, xs, 0.0)

    acc_ref[...] += jnp.sum(xs, axis=-1, keepdims=True)         # (B, Ct, 1)

    @pl.when(i == n_inner - 1)
    def _flush():
        part_ref[0] = acc_ref[...]


# ---------------------------------------------------------------------------
# Pass 1.5: combine partials + squeeze MLP + three softmax heads (tiny)
# ---------------------------------------------------------------------------
def _head_kernel(part_ref, w_share_ref, b_share_ref,
                 gamma_ref, beta_ref, mean_ref, var_ref,
                 w_heads_ref, b_heads_ref, w_out_ref, *, inv_hw):
    pooled = jnp.sum(part_ref[...], axis=0) * inv_hw            # (B, C)

    # fc_share: Linear(C, 16) + BatchNorm1d(16) (eval) + ReLU
    h = jnp.dot(pooled, w_share_ref[...],
                preferred_element_type=jnp.float32) + b_share_ref[...]
    h = (h - mean_ref[...]) * jax.lax.rsqrt(var_ref[...] + 1e-5)
    h = h * gamma_ref[...] + beta_ref[...]
    h = jnp.maximum(h, 0.0)                                     # (B, 16)

    # Three heads: Linear(16, C) + softmax over channels.  Separate head axis
    # keeps every slice layout-clean; exact reciprocal (tiny epilogue path).
    for k in range(3):
        lg = jnp.dot(h, w_heads_ref[k],
                     preferred_element_type=jnp.float32) + b_heads_ref[k]
        lg = lg - jnp.max(lg, axis=1, keepdims=True)
        e = jnp.exp(lg)
        w_out_ref[k] = e / jnp.sum(e, axis=1, keepdims=True)


# ---------------------------------------------------------------------------
# Pass 2: lane-dense, fully pipelined per-channel blend of the three inputs
# ---------------------------------------------------------------------------
def _blend_kernel(w_ref, x0_ref, x1_ref, x2_ref, out_ref):
    # w_ref: (3, B, Ct, 1) f32, broadcasts over the lane (spatial) dim.
    out = (w_ref[0] * x0_ref[...].astype(jnp.float32)
           + w_ref[1] * x1_ref[...].astype(jnp.float32)
           + w_ref[2] * x2_ref[...].astype(jnp.float32))
    out_ref[...] = out.astype(out_ref.dtype)


# ---------------------------------------------------------------------------
# Wrapper
# ---------------------------------------------------------------------------
def attention_forward(in_x, params, *, tile_hw=None, c_tile=None, n_outer=None):
    """in_x: tuple of three (B, C, H, W) arrays (f32 or bf16; streamed as-is)."""
    x0, x1, x2 = in_x
    assert x0.shape == x1.shape == x2.shape
    assert x0.dtype == x1.dtype == x2.dtype
    B, C, H, W = x0.shape
    HW = H * W
    io_dtype = x0.dtype
    io_bytes = jnp.dtype(io_dtype).itemsize

    vmem_cap = _vmem_capacity_bytes()
    small_vmem = vmem_cap <= 80 * _MIB            # v7x-class (64 MiB per TC)
    # ~2.7 MiB slabs on 64 MiB parts, ~5.3 MiB on 128 MiB parts.
    slab_target = int(min(6 * _MIB, max(512 * 1024, vmem_cap // 24)))

    # ---- channel tiling: keep even the minimal 128-lane slab in budget -----
    if c_tile is None:
        budget_c = slab_target // max(1, B * _LANE * io_bytes)
        if budget_c >= C or C <= 8:
            c_tile = C
        else:
            c_tile = min(C, max(8, (budget_c // 8) * 8))
    assert c_tile == C or (c_tile % 8 == 0 and 0 < c_tile <= C)
    n_c = pl.cdiv(C, c_tile)

    # ---- spatial (lane) tiling: largest 128-multiple within the budget -----
    hw_ceil = pl.cdiv(HW, _LANE) * _LANE
    if tile_hw is None:
        budget_hw = slab_target // max(1, B * c_tile * io_bytes)
        tile_hw = _round_down_to(min(budget_hw, hw_ceil), _LANE)
    tile_hw = min(tile_hw, hw_ceil)
    assert tile_hw % _LANE == 0
    n_hw_blocks = pl.cdiv(HW, tile_hw)

    # ---- split the pooling reduction across TensorCores (v7x megacore) -----
    if n_outer is None:
        n_outer = min(2, n_hw_blocks)
    n_outer = max(1, min(n_outer, n_hw_blocks))
    n_inner = pl.cdiv(n_hw_blocks, n_outer)
    needs_mask = (n_outer * n_inner * tile_hw != HW)

    # ---- VMEM budgets (computed from actual buffer usage + headroom) -------
    slab_bytes = B * c_tile * tile_hw * io_bytes
    part_block_bytes = B * c_tile * 4
    in_bufs_b = 3 if small_vmem else 2

    def _vmem_limit(need):
        return int(min(0.9 * vmem_cap, max(32 * _MIB, need + 8 * _MIB)))

    vmem_a = _vmem_limit(3 * 2 * slab_bytes + 4 * part_block_bytes)
    vmem_b = _vmem_limit((3 * in_bufs_b + 2) * slab_bytes
                         + 2 * 3 * part_block_bytes)

    x0f = x0.reshape(B, C, HW)
    x1f = x1.reshape(B, C, HW)
    x2f = x2.reshape(B, C, HW)

    # --- pass 1: partial per-channel sums -----------------------------------
    def x_index_a(c, o, i):
        t = o * n_inner + i
        if n_outer * n_inner > n_hw_blocks:
            t = jnp.minimum(t, n_hw_blocks - 1)
        return (0, c, t)

    x_spec_a = pl.BlockSpec((B, c_tile, tile_hw), x_index_a)
    part_spec = pl.BlockSpec((1, B, c_tile, 1), lambda c, o, i: (o, 0, c, 0))

    partials = pl.pallas_call(
        functools.partial(_pool_partial_kernel, hw=HW, tile_hw=tile_hw,
                          n_inner=n_inner, needs_mask=needs_mask),
        out_shape=jax.ShapeDtypeStruct((n_outer, B, C, 1), jnp.float32),
        grid_spec=pltpu.PrefetchScalarGridSpec(
            num_scalar_prefetch=0,
            grid=(n_c, n_outer, n_inner),
            in_specs=[x_spec_a, x_spec_a, x_spec_a],
            out_specs=part_spec,
            scratch_shapes=[pltpu.VMEM((B, c_tile, 1), jnp.float32)]),
        compiler_params=pltpu.CompilerParams(
            dimension_semantics=("parallel", "parallel", "arbitrary"),
            vmem_limit_bytes=vmem_a),
        cost_estimate=pl.CostEstimate(
            flops=3 * B * C * HW, transcendentals=0,
            bytes_accessed=3 * B * C * HW * io_bytes),
    )(x0f, x1f, x2f)

    # --- pass 1.5: combine + squeeze MLP + softmax heads (tiny) --------------
    pooled_parts = partials.reshape(n_outer, B, C)
    w_heads = jnp.stack([params["w1"], params["w2"], params["w3"]])   # (3,16,C)
    b_heads = jnp.stack([params["b1"], params["b2"], params["b3"]])   # (3,1,C)
    small_params = (
        params["w_share"], params["b_share"],
        params["bn_gamma"], params["bn_beta"],
        params["bn_mean"], params["bn_var"],
        w_heads, b_heads,
    )

    weights = pl.pallas_call(
        functools.partial(_head_kernel, inv_hw=1.0 / HW),
        out_shape=jax.ShapeDtypeStruct((3, B, C), jnp.float32),
        grid_spec=pltpu.PrefetchScalarGridSpec(
            num_scalar_prefetch=0,
            grid=(1,),
            in_specs=[_replicated_spec(pooled_parts.shape)]
                     + [_replicated_spec(p.shape) for p in small_params],
            out_specs=_replicated_spec((3, B, C))),
        compiler_params=pltpu.CompilerParams(
            dimension_semantics=("arbitrary",)),
    )(pooled_parts, *small_params)

    # --- pass 2: tiled, pipelined blend --------------------------------------
    w4 = weights.reshape(3, B, C, 1)
    x_in_spec_b = _maybe_buffered_spec((B, c_tile, tile_hw),
                                       lambda c, t: (0, c, t), in_bufs_b)
    x_out_spec_b = pl.BlockSpec((B, c_tile, tile_hw), lambda c, t: (0, c, t))
    w_spec_b = pl.BlockSpec((3, B, c_tile, 1), lambda c, t: (0, 0, c, 0))

    out = pl.pallas_call(
        _blend_kernel,
        out_shape=jax.ShapeDtypeStruct((B, C, HW), io_dtype),
        grid_spec=pltpu.PrefetchScalarGridSpec(
            num_scalar_prefetch=0,
            grid=(n_c, n_hw_blocks),
            in_specs=[w_spec_b, x_in_spec_b, x_in_spec_b, x_in_spec_b],
            out_specs=x_out_spec_b),
        compiler_params=pltpu.CompilerParams(
            dimension_semantics=("parallel", "parallel"),
            vmem_limit_bytes=vmem_b),
        cost_estimate=pl.CostEstimate(
            flops=6 * B * C * HW, transcendentals=0,
            bytes_accessed=4 * B * C * HW * io_bytes + 3 * B * C * 4),
    )(w4, x0f, x1f, x2f)

    return out.reshape(B, C, H, W)


# ---------------------------------------------------------------------------
# Parameters / reference
# ---------------------------------------------------------------------------
def init_params(key, input_dim):
    """Parameters matching the PyTorch module's shapes (Linear weights are
    pre-transposed to (in, out) so kernels compute x @ W)."""
    ks = jax.random.split(key, 8)
    hid = 16
    return {
        "w_share": jax.random.normal(ks[0], (input_dim, hid), jnp.float32) * 0.2,
        "b_share": jax.random.normal(ks[1], (1, hid), jnp.float32) * 0.1,
        # BatchNorm1d(16) eval-mode params / running stats (non-trivial values)
        "bn_gamma": jnp.full((1, hid), 1.1, jnp.float32),
        "bn_beta":  jnp.full((1, hid), 0.05, jnp.float32),
        "bn_mean":  jnp.full((1, hid), 0.02, jnp.float32),
        "bn_var":   jnp.full((1, hid), 0.9, jnp.float32),
        "w1": jax.random.normal(ks[2], (hid, input_dim), jnp.float32) * 0.2,
        "b1": jax.random.normal(ks[3], (1, input_dim), jnp.float32) * 0.1,
        "w2": jax.random.normal(ks[4], (hid, input_dim), jnp.float32) * 0.2,
        "b2": jax.random.normal(ks[5], (1, input_dim), jnp.float32) * 0.1,
        "w3": jax.random.normal(ks[6], (hid, input_dim), jnp.float32) * 0.2,
        "b3": jax.random.normal(ks[7], (1, input_dim), jnp.float32) * 0.1,
    }


def _reference_forward(in_x, params):
    """Pure-JAX f32 reference for sanity checking the kernels."""
    x0, x1, x2 = in_x
    pooled = jnp.mean(x0 + x1 + x2, axis=(2, 3))                     # (B, C)
    h = pooled @ params["w_share"] + params["b_share"]
    h = (h - params["bn_mean"]) * jax.lax.rsqrt(params["bn_var"] + 1e-5)
    h = h * params["bn_gamma"] + params["bn_beta"]
    h = jnp.maximum(h, 0.0)

    def head(w, b):
        return jax.nn.softmax(h @ w + b, axis=1)

    a1 = head(params["w1"], params["b1"])[:, :, None, None]
    a2 = head(params["w2"], params["b2"])[:, :, None, None]
    a3 = head(params["w3"], params["b3"])[:, :, None, None]
    return a1 * x0 + a2 * x1 + a3 * x2


if __name__ == "__main__":
    key = jax.random.PRNGKey(0)

    def run_case(B, C, H, W, io_dtype, tol, **kw):
        case_key = jax.random.fold_in(key, B * 1000 + C * 100 + H * 10 + W)
        k_in, k_p = jax.random.split(case_key)
        k0, k1, k2 = jax.random.split(k_in, 3)
        xs32 = [jax.random.normal(k, (B, C, H, W), jnp.float32)
                for k in (k0, k1, k2)]
        in_x = tuple(x.astype(io_dtype) for x in xs32)
        params = init_params(k_p, C)

        out = attention_forward(in_x, params, **kw)
        out = jax.block_until_ready(out)
        assert out.shape == (B, C, H, W) and out.dtype == io_dtype

        ref_in = tuple(x.astype(jnp.float32) for x in in_x)
        ref = _reference_forward(ref_in, params)
        ok = jnp.allclose(out.astype(jnp.float32), ref, atol=tol, rtol=tol)
        assert bool(ok), f"kernel mismatch vs reference for case {(B, C, H, W)}"

    # bf16 streaming I/O, channel tiling (c_tile=8 of C=16), 2x2 outer/inner
    # spatial grid -> exercises the parallel partial sums + inner accumulation.
    run_case(2, 16, 16, 32, jnp.bfloat16, 2e-2, tile_hw=128, c_tile=8, n_outer=2)

    # f32 I/O with ragged spatial extent (H*W = 35 < 128) -> exercises the
    # in-kernel lane mask and masked boundary write-back (no H*W constraint).
    run_case(2, 4, 5, 7, jnp.float32, 1e-4)

    print("KERNEL_OK")
</pallas_src>

<mosaic_0001>
module attributes {stable_mosaic.version = 11 : i64} {
  func.func @_pool_partial_kernel(%arg0: i32, %arg1: i32, %arg2: i32, %arg3: memref<2x8x128xbf16, #tpu.memory_space<vmem>>, %arg4: memref<2x8x128xbf16, #tpu.memory_space<vmem>>, %arg5: memref<2x8x128xbf16, #tpu.memory_space<vmem>>, %arg6: memref<1x2x8x1xf32, #tpu.memory_space<vmem>>, %arg7: memref<2x8x1xf32, #tpu.memory_space<vmem>>) attributes {dimension_semantics = [#tpu.dimension_semantics<parallel>, #tpu.dimension_semantics<parallel>, #tpu.dimension_semantics<arbitrary>], iteration_bounds = array<i64: 2, 2, 2>, scalar_prefetch = 0 : i64, scratch_operands = 1 : i64, tpu.core_type = #tpu.core_type<tc>, window_params = [{transform_indices = @transform_0, window_bounds = array<i64: 2, 8, 128>}, {transform_indices = @transform_1, window_bounds = array<i64: 2, 8, 128>}, {transform_indices = @transform_2, window_bounds = array<i64: 2, 8, 128>}, {transform_indices = @transform_3, window_bounds = array<i64: 1, 2, 8, 1>}]} {
    %c0_i32 = arith.constant 0 : i32
    %0 = arith.cmpi eq, %arg2, %c0_i32 : i32
    %1 = arith.extui %0 : i1 to i32
    %c0_i32_0 = arith.constant 0 : i32
    %2 = arith.cmpi ne, %1, %c0_i32_0 : i32
    scf.if %2 {
      %cst_16 = arith.constant 0.000000e+00 : f32
      %19 = vector.broadcast %cst_16 : f32 to vector<2x8x1xf32>
      %c0_17 = arith.constant 0 : index
      %c0_18 = arith.constant 0 : index
      %c0_19 = arith.constant 0 : index
      %20 = vector.load %arg7[%c0_17, %c0_18, %c0_19] : memref<2x8x1xf32, #tpu.memory_space<vmem>>, vector<2x8x1xf32>
      tpu.vector_store %arg7[%c0_17, %c0_18, %c0_19], %19 {strides = array<i32>} : memref<2x8x1xf32, #tpu.memory_space<vmem>>, vector<2x8x1xf32>,
    } else {
    }
    %c0 = arith.constant 0 : index
    %c0_1 = arith.constant 0 : index
    %c0_2 = arith.constant 0 : index
    %3 = vector.load %arg3[%c0, %c0_1, %c0_2] : memref<2x8x128xbf16, #tpu.memory_space<vmem>>, vector<2x8x128xbf16>
    %4 = arith.extf %3 : vector<2x8x128xbf16> to vector<2x8x128xf32>
    %c0_3 = arith.constant 0 : index
    %c0_4 = arith.constant 0 : index
    %c0_5 = arith.constant 0 : index
    %5 = vector.load %arg4[%c0_3, %c0_4, %c0_5] : memref<2x8x128xbf16, #tpu.memory_space<vmem>>, vector<2x8x128xbf16>
    %6 = arith.extf %5 : vector<2x8x128xbf16> to vector<2x8x128xf32>
    %7 = arith.addf %4, %6 : vector<2x8x128xf32>
    %c0_6 = arith.constant 0 : index
    %c0_7 = arith.constant 0 : index
    %c0_8 = arith.constant 0 : index
    %8 = vector.load %arg5[%c0_6, %c0_7, %c0_8] : memref<2x8x128xbf16, #tpu.memory_space<vmem>>, vector<2x8x128xbf16>
    %9 = arith.extf %8 : vector<2x8x128xbf16> to vector<2x8x128xf32>
    %10 = arith.addf %7, %9 : vector<2x8x128xf32>
    %c0_9 = arith.constant 0 : index
    %c0_10 = arith.constant 0 : index
    %c0_11 = arith.constant 0 : index
    %11 = vector.load %arg7[%c0_9, %c0_10, %c0_11] : memref<2x8x1xf32, #tpu.memory_space<vmem>>, vector<2x8x1xf32>
    %cst = arith.constant dense<0.000000e+00> : vector<2x8xf32>
    %12 = vector.multi_reduction <add>, %10, %cst [2] : vector<2x8x128xf32> to vector<2x8xf32>
    %13 = vector.shape_cast %12 : vector<2x8xf32> to vector<2x8x1xf32>
    %14 = arith.addf %11, %13 : vector<2x8x1xf32>
    %c0_12 = arith.constant 0 : index
    %c0_13 = arith.constant 0 : index
    %c0_14 = arith.constant 0 : index
    %15 = vector.load %arg7[%c0_12, %c0_13, %c0_14] : memref<2x8x1xf32, #tpu.memory_space<vmem>>, vector<2x8x1xf32>
    tpu.vector_store %arg7[%c0_12, %c0_13, %c0_14], %14 {strides = array<i32>} : memref<2x8x1xf32, #tpu.memory_space<vmem>>, vector<2x8x1xf32>,
    %c1_i32 = arith.constant 1 : i32
    %16 = arith.cmpi eq, %arg2, %c1_i32 : i32
    %17 = arith.extui %16 : i1 to i32
    %c0_i32_15 = arith.constant 0 : i32
    %18 = arith.cmpi ne, %17, %c0_i32_15 : i32
    scf.if %18 {
      %c0_16 = arith.constant 0 : index
      %c0_17 = arith.constant 0 : index
      %c0_18 = arith.constant 0 : index
      %19 = vector.load %arg7[%c0_16, %c0_17, %c0_18] : memref<2x8x1xf32, #tpu.memory_space<vmem>>, vector<2x8x1xf32>
      %c0_19 = arith.constant 0 : index
      %c0_20 = arith.constant 0 : index
      %c0_21 = arith.constant 0 : index
      %c0_22 = arith.constant 0 : index
      %20 = vector.load %arg6[%c0_19, %c0_20, %c0_21, %c0_22] : memref<1x2x8x1xf32, #tpu.memory_space<vmem>>, vector<1x2x8x1xf32>
      %21 = vector.shape_cast %20 : vector<1x2x8x1xf32> to vector<2x8x1xf32>
      %22 = vector.shape_cast %19 : vector<2x8x1xf32> to vector<1x2x8x1xf32>
      tpu.vector_store %arg6[%c0_19, %c0_20, %c0_21, %c0_22], %22 {strides = array<i32>} : memref<1x2x8x1xf32, #tpu.memory_space<vmem>>, vector<1x2x8x1xf32>,
    } else {
    }
    return
  }
  func.func @transform_0(%arg0: i32, %arg1: i32, %arg2: i32) -> (i32, i32, i32) {
    %c2_i32 = arith.constant 2 : i32
    %0 = arith.muli %arg1, %c2_i32 : i32
    %1 = arith.addi %0, %arg2 : i32
    %c0_i32 = arith.constant 0 : i32
    %c0_i32_0 = arith.constant 0 : i32
    return %c0_i32, %arg0, %1 : i32, i32, i32
  }
  func.func @transform_1(%arg0: i32, %arg1: i32, %arg2: i32) -> (i32, i32, i32) {
    %c2_i32 = arith.constant 2 : i32
    %0 = arith.muli %arg1, %c2_i32 : i32
    %1 = arith.addi %0, %arg2 : i32
    %c0_i32 = arith.constant 0 : i32
    %c0_i32_0 = arith.constant 0 : i32
    return %c0_i32, %arg0, %1 : i32, i32, i32
  }
  func.func @transform_2(%arg0: i32, %arg1: i32, %arg2: i32) -> (i32, i32, i32) {
    %c2_i32 = arith.constant 2 : i32
    %0 = arith.muli %arg1, %c2_i32 : i32
    %1 = arith.addi %0, %arg2 : i32
    %c0_i32 = arith.constant 0 : i32
    %c0_i32_0 = arith.constant 0 : i32
    return %c0_i32, %arg0, %1 : i32, i32, i32
  }
  func.func @transform_3(%arg0: i32, %arg1: i32, %arg2: i32) -> (i32, i32, i32, i32) {
    %c0_i32 = arith.constant 0 : i32
    %c0_i32_0 = arith.constant 0 : i32
    %c0_i32_1 = arith.constant 0 : i32
    return %arg1, %c0_i32, %arg0, %c0_i32_0 : i32, i32, i32, i32
  }
}

</mosaic_0001>

<llo_original>
// kernel: tpu_custom_call.1
$region0: #{tpu_custom_call.1}
  #allocation0 [shape = 'u32[]', space=smem, size = 0x4, offset = 0x4, fixed_abs, tag = 'smem constant byte address 0x4 - core index']
  #allocation1 [shape = 'u32[144,128]{1,0:T(1,128)}', space=vmem, size = 0x12000, scoped, tag = 'internal scratch']
  #allocation2 [shape = 'f32[2,8,1]{2,1,0:T(8,128)}', space=vmem, size = 0x2000, scoped, tag = 'scratch operand']
  %s0 = inlined_call_operand.hbm [shape: bf16[2,16,512], index: 0, kind: input, shape index: {}]
  %s1 = inlined_call_operand.hbm [shape: bf16[2,16,512], index: 1, kind: input, shape index: {}]
  %s2 = inlined_call_operand.hbm [shape: bf16[2,16,512], index: 2, kind: input, shape index: {}]
  %s3 = inlined_call_operand.vmem [shape: f32[2,2,16,1], index: 3, kind: output, shape index: {}]
  %s4 = sld [smem:[#allocation0]]
  $region99: #{tpu_custom_call.1} parent=0
    _
  %s6 = ssub.s32 1, %s4
  %s7 = scalar_select 0, %s6, %s4
  $region1: #{tpu_custom_call.1} parent=0
    #allocation3 [shape = 'u8[8192]{0}', space=vmem, size = 0x2000, scoped, tag = 'input window, operand 0']
    #allocation4 [shape = 's32[2]{0}', space=sflag, size = 0x8, scoped, tag = 'scoped memory for tpu_custom_call.1']
    #allocation5 [shape = 'u8[8192]{0}', space=vmem, size = 0x2000, scoped, tag = 'input window, operand 1']
    #allocation6 [shape = 's32[2]{0}', space=sflag, size = 0x8, scoped, tag = 'scoped memory for tpu_custom_call.1']
    #allocation7 [shape = 'u8[8192]{0}', space=vmem, size = 0x2000, scoped, tag = 'input window, operand 2']
    #allocation8 [shape = 'u8[16384]{0}', space=vmem, size = 0x4000, scoped, tag = 'output window, operand 0']
    %8 = vsyncpa [#allocation4], 0
    %s9 = scalar_lea.sflag [#allocation4], 1
    %10 = vsyncpa %s9, 0
    %11 = vsyncpa [#allocation6], 0
    %s12 = scalar_lea.sflag [#allocation6], 1
    %13 = vsyncpa %s12, 0
    loop: start=0, step=1, limit=10
    $region2: #{tpu_custom_call.1} parent=1 // loop_pre_header
      _
    $region3: #{tpu_custom_call.1} parent=1 // loop_header
      %s15 = sphi 0, %s19
      %p16 = scmp.ge.s32.totalorder %s15, 10
      %s22 = sphi 0, %s41
      %s23 = sphi 0, %s37
      %s24 = sphi 0, %s33
      %s25 = sphi 0, %s22
      %s26 = sphi 0, %s23
      %s27 = sphi 0, %s24
      %s28 = sphi 0, %s25
      %s29 = sphi 0, %s26
      %s30 = sphi 0, %s27
      %s50 = sphi 0, %s52
      %s53 = sphi 0, %s50
      %s54 = sphi 0, %s53
      %s70 = sphi 0, %s54
      %s82 = sphi 0, %s84
      %s85 = sphi 0, %s82
      %s86 = sphi 0, %s85
      %s102 = sphi 0, %s86
      %s114 = sphi 0, %s116
      %s117 = sphi 0, %s114
      %s118 = sphi 0, %s117
      %s134 = sphi 0, %s118
      %s142 = sphi 0, %s144
      %s145 = sphi 0, %s142
      %s146 = sphi 0, %s145
      %s162 = sphi 0, %s146
    $region4: #{tpu_custom_call.1} parent=1 // loop_header_branch
      %18 = sbr.rel (%p16) target = $region8
    $region5: #{tpu_custom_call.1} parent=1 // loop_body
      %s20 = ssub.s32 %s15, 1
      %s21 = ssub.s32 %s15, 2
      %s31 = sadd.s32 1, %s24
      %p32 = scmp.ge.s32.totalorder %s31, 2
      %s33 = scalar_select %p32, 0, %s31
      %s34 = sadd.s32 1, %s23
      %s35 = scalar_select %p32, %s34, %s23
      %p36 = scmp.ge.s32.totalorder %s35, 2
      %s37 = scalar_select %p36, 0, %s35
      %s38 = sadd.s32 1, %s22
      %s39 = scalar_select %p36, %s38, %s22
      %p40 = scmp.ge.s32.totalorder %s39, 2
      %s41 = scalar_select %p40, 0, %s39
      %s42 = smul.u32 %s23, 2
      %s43 = sadd.s32 %s42, %s24
      %s44 = smul.u32 %s37, 2
      %s45 = sadd.s32 %s44, %s33
      %s46 = ssub.s32 %s22, %s41
      %s47 = ssub.s32 %s43, %s45
      %s48 = sor.u32 %s46, %s47
      %p49 = scmp.eq.s32.totalorder %s48, 0
      %s51 = sadd.s32 %s50, 1
      %s52 = scalar_select %p49, %s50, %s51
      %p55 = pneg %p49
      %p56 = scmp.eq.s32.totalorder %s15, 7
      %p57 = por %p55, %p56
      %p58 = scmp.ne.s32.totalorder %s50, %s53
      %p59 = scmp.eq.s32.totalorder %s15, 0
      %p60 = por %p58, %p59
      %p61 = scmp.ne.s32.totalorder %s50, %s53
      %p62 = scmp.eq.s32.totalorder %s20, 7
      %p63 = por %p61, %p62
      %p64 = scmp.ne.s32.totalorder %s53, %s54
      %p65 = scmp.eq.s32.totalorder %s20, 0
      %p66 = por %p64, %p65
      %p67 = scmp.ne.s32.totalorder %s53, %s54
      %p68 = scmp.eq.s32.totalorder %s21, 7
      %p69 = por %p67, %p68
      %p71 = scmp.ne.s32.totalorder %s54, %s70
      %p72 = scmp.eq.s32.totalorder %s21, 0
      %p73 = por %p71, %p72
      %s74 = smul.u32 %s23, 2
      %s75 = sadd.s32 %s74, %s24
      %s76 = smul.u32 %s37, 2
      %s77 = sadd.s32 %s76, %s33
      %s78 = ssub.s32 %s22, %s41
      %s79 = ssub.s32 %s75, %s77
      %s80 = sor.u32 %s78, %s79
      %p81 = scmp.eq.s32.totalorder %s80, 0
      %s83 = sadd.s32 %s82, 1
      %s84 = scalar_select %p81, %s82, %s83
      %p87 = pneg %p81
      %p88 = scmp.eq.s32.totalorder %s15, 7
      %p89 = por %p87, %p88
      %p90 = scmp.ne.s32.totalorder %s82, %s85
      %p91 = scmp.eq.s32.totalorder %s15, 0
      %p92 = por %p90, %p91
      %p93 = scmp.ne.s32.totalorder %s82, %s85
      %p94 = scmp.eq.s32.totalorder %s20, 7
      %p95 = por %p93, %p94
      %p96 = scmp.ne.s32.totalorder %s85, %s86
      %p97 = scmp.eq.s32.totalorder %s20, 0
      %p98 = por %p96, %p97
      %p99 = scmp.ne.s32.totalorder %s85, %s86
      %p100 = scmp.eq.s32.totalorder %s21, 7
      %p101 = por %p99, %p100
      %p103 = scmp.ne.s32.totalorder %s86, %s102
      %p104 = scmp.eq.s32.totalorder %s21, 0
      %p105 = por %p103, %p104
      %s106 = smul.u32 %s23, 2
      %s107 = sadd.s32 %s106, %s24
      %s108 = smul.u32 %s37, 2
      %s109 = sadd.s32 %s108, %s33
      %s110 = ssub.s32 %s22, %s41
      %s111 = ssub.s32 %s107, %s109
      %s112 = sor.u32 %s110, %s111
      %p113 = scmp.eq.s32.totalorder %s112, 0
      %s115 = sadd.s32 %s114, 1
      %s116 = scalar_select %p113, %s114, %s115
      %p119 = pneg %p113
      %p120 = scmp.eq.s32.totalorder %s15, 7
      %p121 = por %p119, %p120
      %p122 = scmp.ne.s32.totalorder %s114, %s117
      %p123 = scmp.eq.s32.totalorder %s15, 0
      %p124 = por %p122, %p123
      %p125 = scmp.ne.s32.totalorder %s114, %s117
      %p126 = scmp.eq.s32.totalorder %s20, 7
      %p127 = por %p125, %p126
      %p128 = scmp.ne.s32.totalorder %s117, %s118
      %p129 = scmp.eq.s32.totalorder %s20, 0
      %p130 = por %p128, %p129
      %p131 = scmp.ne.s32.totalorder %s117, %s118
      %p132 = scmp.eq.s32.totalorder %s21, 7
      %p133 = por %p131, %p132
      %p135 = scmp.ne.s32.totalorder %s118, %s134
      %p136 = scmp.eq.s32.totalorder %s21, 0
      %p137 = por %p135, %p136
      %s138 = ssub.s32 %s23, %s37
      %s139 = ssub.s32 %s22, %s41
      %s140 = sor.u32 %s138, %s139
      %p141 = scmp.eq.s32.totalorder %s140, 0
      %s143 = sadd.s32 %s142, 1
      %s144 = scalar_select %p141, %s142, %s143
      %p147 = pneg %p141
      %p148 = scmp.eq.s32.totalorder %s15, 7
      %p149 = por %p147, %p148
      %p150 = scmp.ne.s32.totalorder %s142, %s145
      %p151 = scmp.eq.s32.totalorder %s15, 0
      %p152 = por %p150, %p151
      %p153 = scmp.ne.s32.totalorder %s142, %s145
      %p154 = scmp.eq.s32.totalorder %s20, 7
      %p155 = por %p153, %p154
      %p156 = scmp.ne.s32.totalorder %s145, %s146
      %p157 = scmp.eq.s32.totalorder %s20, 0
      %p158 = por %p156, %p157
      %p159 = scmp.ne.s32.totalorder %s145, %s146
      %p160 = scmp.eq.s32.totalorder %s21, 7
      %p161 = por %p159, %p160
      %p163 = scmp.ne.s32.totalorder %s146, %s162
      %p164 = scmp.eq.s32.totalorder %s21, 0
      %p165 = por %p163, %p164
      %p166 = scmp.le.s32.totalorder 1, %s15
      %p167 = scmp.lt.s32.totalorder %s15, 9
      %p168 = pnand %p166, %p167
      %p169 = pneg %p168
      // Predicated region
      $region9: #{tpu_custom_call.1} parent=5 // pred_check
        _
      $region10: #{tpu_custom_call.1} parent=5 // pred_check_branch
        %171 = sbr.rel (%p168) target = $region12
      $region11: #{tpu_custom_call.1} parent=5 // pred_region
        %s172 = ssub.s32 %s15, 1
      $region12: #{tpu_custom_call.1} parent=5 // pred_fallthru
        _
      %p173 = scmp.lt.s32.totalorder %s15, 8
      // Predicated region
      $region13: #{tpu_custom_call.1} parent=5 // pred_check
        %p174 = pneg %p173
      $region14: #{tpu_custom_call.1} parent=5 // pred_check_branch
        %176 = sbr.rel (%p174) target = $region16
      $region15: #{tpu_custom_call.1} parent=5 // pred_region
        // Predicated region
        $region17: #{tpu_custom_call.1} parent=15 // pred_check
          %p177 = pneg %p60
        $region18: #{tpu_custom_call.1} parent=15 // pred_check_branch
          %179 = sbr.rel (%p177) target = $region20
        $region19: #{tpu_custom_call.1} parent=15 // pred_region
          %s180 = sand.u32 %s50, 1
          %s181 = scalar_lea.sflag [#allocation4], %s180
          %s182 = sand.u32 %s50, 1
          %s183 = smul.addr %s182, 8
          %s184 = scalar_lea.vmem [#allocation3], %s183
          %s185 = smul.u32 %s23, 2
          %s186 = sadd.s32 %s185, %s24
          %s188 = ssub.s32 128, 128
          %189 = vsyncadd %s181, %s188
          %s190 = smul.addr %s22, 4
          %s191 = sadd.s32 %s186, %s190
          %s192 = smul.addr %s191, 64
          %s193 = scalar_lea.hbm %s0, %s192
          %s194 = sshll.u32 %s184, 4
          %s195 = int_to_ptr.vmem [resolvable:$true] %s194
          %200 = dma.hbm_to_vmem [thread:$0]  %s193, 128, %s195, %s181, 512, 64, 4
        $region20: #{tpu_custom_call.1} parent=15 // pred_fallthru
          _
        // Predicated region
        $region21: #{tpu_custom_call.1} parent=15 // pred_check
          %p201 = pneg %p92
        $region22: #{tpu_custom_call.1} parent=15 // pred_check_branch
          %203 = sbr.rel (%p201) target = $region24
        $region23: #{tpu_custom_call.1} parent=15 // pred_region
          %s204 = sand.u32 %s15, 1
          %s205 = scalar_lea.sflag [#allocation6], %s204
          %s206 = sand.u32 %s82, 1
          %s207 = smul.addr %s206, 8
          %s208 = scalar_lea.vmem [#allocation5], %s207
          %s209 = smul.u32 %s23, 2
          %s210 = sadd.s32 %s209, %s24
          %s212 = ssub.s32 128, 128
          %213 = vsyncadd %s205, %s212
          %s214 = smul.addr %s22, 4
          %s215 = sadd.s32 %s210, %s214
          %s216 = smul.addr %s215, 64
          %s217 = scalar_lea.hbm %s1, %s216
          %s218 = sshll.u32 %s208, 4
          %s219 = int_to_ptr.vmem [resolvable:$true] %s218
          %224 = dma.hbm_to_vmem [thread:$0]  %s217, 128, %s219, %s205, 512, 64, 4
        $region24: #{tpu_custom_call.1} parent=15 // pred_fallthru
          _
        // Predicated region
        $region25: #{tpu_custom_call.1} parent=15 // pred_check
          %p225 = pneg %p124
        $region26: #{tpu_custom_call.1} parent=15 // pred_check_branch
          %227 = sbr.rel (%p225) target = $region28
        $region27: #{tpu_custom_call.1} parent=15 // pred_region
          %s228 = sand.u32 %s15, 1
          %s229 = scalar_lea.sflag [#allocation6], %s228
          %s230 = sand.u32 %s114, 1
          %s231 = smul.addr %s230, 8
          %s232 = scalar_lea.vmem [#allocation7], %s231
          %s233 = smul.u32 %s23, 2
          %s234 = sadd.s32 %s233, %s24
          %s236 = ssub.s32 128, 128
          %237 = vsyncadd %s229, %s236
          %s238 = smul.addr %s22, 4
          %s239 = sadd.s32 %s234, %s238
          %s240 = smul.addr %s239, 64
          %s241 = scalar_lea.hbm %s2, %s240
          %s242 = sshll.u32 %s232, 4
          %s243 = int_to_ptr.vmem [resolvable:$true] %s242
          %248 = dma.hbm_to_vmem [thread:$0]  %s241, 128, %s243, %s229, 512, 64, 4
        $region28: #{tpu_custom_call.1} parent=15 // pred_fallthru
          _
      $region16: #{tpu_custom_call.1} parent=5 // pred_fallthru
        _
      %p249 = scmp.le.s32.totalorder 1, %s15
      %p250 = scmp.lt.s32.totalorder %s15, 9
      %p251 = pnand %p249, %p250
      %p252 = pneg %p251
      // Predicated region
      $region29: #{tpu_custom_call.1} parent=5 // pred_check
        _
      $region30: #{tpu_custom_call.1} parent=5 // pred_check_branch
        %254 = sbr.rel (%p251) target = $region32
      $region31: #{tpu_custom_call.1} parent=5 // pred_region
        %s255 = ssub.s32 %s15, 1
        %s256 = sand.u32 %s53, 1
        %s257 = scalar_lea.sflag [#allocation4], %s256
        %s258 = sand.u32 %s53, 1
        %s259 = smul.addr %s258, 8
        %s260 = scalar_lea.vmem [#allocation3], %s259
        // Predicated region
        $region33: #{tpu_custom_call.1} parent=31 // pred_check
          %p261 = pneg %p66
        $region34: #{tpu_custom_call.1} parent=31 // pred_check_branch
          %263 = sbr.rel (%p261) target = $region36
        $region35: #{tpu_custom_call.1} parent=31 // pred_region
          %264 = dma.done %s257, 128
        $region36: #{tpu_custom_call.1} parent=31 // pred_fallthru
          _
        %s265 = sand.u32 %s20, 1
        %s266 = scalar_lea.sflag [#allocation6], %s265
        %s267 = sand.u32 %s85, 1
        %s268 = smul.addr %s267, 8
        %s269 = scalar_lea.vmem [#allocation5], %s268
        // Predicated region
        $region37: #{tpu_custom_call.1} parent=31 // pred_check
          %p270 = pneg %p98
        $region38: #{tpu_custom_call.1} parent=31 // pred_check_branch
          %272 = sbr.rel (%p270) target = $region40
        $region39: #{tpu_custom_call.1} parent=31 // pred_region
          %273 = dma.done %s266, 128
        $region40: #{tpu_custom_call.1} parent=31 // pred_fallthru
          _
        %s274 = sand.u32 %s20, 1
        %s275 = scalar_lea.sflag [#allocation6], %s274
        %s276 = sand.u32 %s117, 1
        %s277 = smul.addr %s276, 8
        %s278 = scalar_lea.vmem [#allocation7], %s277
        // Predicated region
        $region41: #{tpu_custom_call.1} parent=31 // pred_check
          %p279 = pneg %p130
        $region42: #{tpu_custom_call.1} parent=31 // pred_check_branch
          %281 = sbr.rel (%p279) target = $region44
        $region43: #{tpu_custom_call.1} parent=31 // pred_region
          %282 = dma.done %s275, 128
        $region44: #{tpu_custom_call.1} parent=31 // pred_fallthru
          _
        %s283 = sand.u32 %s53, 1
        %s284 = scalar_lea.sflag [#allocation4], %s283
        %s285 = sand.u32 %s53, 1
        %s286 = smul.addr %s285, 8
        %s287 = scalar_lea.vmem [#allocation3], %s286
        %p288 = pneg %p66
        %p289 = pneg %p63
        %s290 = sand.u32 %s20, 1
        %s291 = scalar_lea.sflag [#allocation6], %s290
        %s292 = sand.u32 %s85, 1
        %s293 = smul.addr %s292, 8
        %s294 = scalar_lea.vmem [#allocation5], %s293
        %p295 = pneg %p98
        %p296 = pneg %p95
        %s297 = sand.u32 %s20, 1
        %s298 = scalar_lea.sflag [#allocation6], %s297
        %s299 = sand.u32 %s117, 1
        %s300 = smul.addr %s299, 8
        %s301 = scalar_lea.vmem [#allocation7], %s300
        %p302 = pneg %p130
        %p303 = pneg %p127
        %p304 = pneg %p158
        %p305 = pneg %p155
        %s306 = sand.u32 %s145, 1
        %s307 = sand.u32 %s145, 1
        %s308 = smul.addr %s307, 16
        %s309 = scalar_lea.vmem [#allocation8], %s308
        %s310 = smul.u32 %s26, 2
        %s311 = sadd.s32 %s310, %s27
        %s312 = smul.u32 %s26, 2
        %s313 = sadd.s32 %s312, %s27
        %s314 = smul.u32 %s26, 2
        %s315 = sadd.s32 %s314, %s27
        %p316 = scmp.eq.s32.totalorder %s27, 0
        // Predicated region
        $region45: #{tpu_custom_call.1} parent=31 // pred_check
          %p317 = pneg %p316
        $region46: #{tpu_custom_call.1} parent=31 // pred_check_branch
          %319 = sbr.rel (%p317) target = $region48
        $region47: #{tpu_custom_call.1} parent=31 // pred_region
          %vm320 = vcmask 7168
          %321 = vst.msk [vmem:[#allocation2] sm:$0xff] %vm320, 0.0
          %322 = vst.msk [vmem:[#allocation2 + $0x8] sm:$0xff] %vm320, 0.0
        $region48: #{tpu_custom_call.1} parent=31 // pred_fallthru
          _
        %v323 = vld [vmem:[%s260] sm:$0xf]
        %v324 = vld [vmem:[%s260 + $0x4] sm:$0xf]
        %v325 = vunpack.c.l.bf16 %v323
        %v326 = vunpack.c.l.bf16 %v324
        %v327 = vld [vmem:[%s269] sm:$0xf]
        %v328 = vld [vmem:[%s269 + $0x4] sm:$0xf]
        %v329 = vunpack.c.l.bf16 %v327
        %v330 = vunpack.c.l.bf16 %v328
        %v331 = vadd.f32 %v325, %v329
        %v332 = vadd.f32 %v326, %v330
        %v333 = vld [vmem:[%s278] sm:$0xf]
        %v334 = vld [vmem:[%s278 + $0x4] sm:$0xf]
        %v335 = vunpack.c.l.bf16 %v333
        %v336 = vunpack.c.l.bf16 %v334
        %v337 = vadd.f32 %v331, %v335
        %v338 = vadd.f32 %v332, %v336
        %v339 = vld [vmem:[#allocation2] sm:$0xff]
        %v340 = vld [vmem:[#allocation2 + $0x8] sm:$0xff]
        %341 = vadd.xlane.f32.xlu0 %v337
        %v342 = vpop.xlane.xlu0 %341
        %343 = vadd.xlane.f32.xlu0 %v338
        %v344 = vpop.xlane.xlu0 %343
        %v345 = vadd.f32 %v339, %v342
        %v346 = vadd.f32 %v340, %v344
        %vm347 = vcmask 7168
        %348 = vst.msk [vmem:[#allocation2] sm:$0xff] %vm347, %v345
        %349 = vst.msk [vmem:[#allocation2 + $0x8] sm:$0xff] %vm347, %v346
        %p350 = scmp.eq.s32.totalorder %s27, 1
        // Predicated region
        $region49: #{tpu_custom_call.1} parent=31 // pred_check
          %p351 = pneg %p350
        $region50: #{tpu_custom_call.1} parent=31 // pred_check_branch
          %353 = sbr.rel (%p351) target = $region52
        $region51: #{tpu_custom_call.1} parent=31 // pred_region
          %v354 = vld [vmem:[#allocation2] sm:$0xff]
          %v355 = vld [vmem:[#allocation2 + $0x8] sm:$0xff]
          %356 = vst.msk [vmem:[%s309] sm:$0xff] %vm347, %v354
          %357 = vst.msk [vmem:[%s309 + $0x8] sm:$0xff] %vm347, %v355
        $region52: #{tpu_custom_call.1} parent=31 // pred_fallthru
          _
        %s358 = sand.u32 %s145, 1
        %s359 = sand.u32 %s145, 1
        %s360 = smul.addr %s359, 16
        %s361 = scalar_lea.vmem [#allocation8], %s360
        // Predicated region
        $region53: #{tpu_custom_call.1} parent=31 // pred_check
          %p362 = pneg %p155
        $region54: #{tpu_custom_call.1} parent=31 // pred_check_branch
          %364 = sbr.rel (%p362) target = $region56
        $region55: #{tpu_custom_call.1} parent=31 // pred_region
          %s365 = smul.addr %s26, 4
          %s366 = sadd.s32 %s25, %s365
          %s367 = smul.addr %s366, 8
          %s368 = scalar_lea.vmem %s3, %s367
          // Predicated region
          $region57: #{tpu_custom_call.1} parent=55 // pred_check
            _
          $region58: #{tpu_custom_call.1} parent=55 // pred_check_branch
            %370 = sbr.rel (0) target = $region60
          $region59: #{tpu_custom_call.1} parent=55 // pred_region
            // Predicated region
            $region61: #{tpu_custom_call.1} parent=59 // pred_check
              _
            $region62: #{tpu_custom_call.1} parent=59 // pred_check_branch
              %372 = sbr.rel (0) target = $region64
            $region63: #{tpu_custom_call.1} parent=59 // pred_region
              // Predicated region
              $region76: #{tpu_custom_call.1} parent=63 // pred_check
                _
              $region77: #{tpu_custom_call.1} parent=63 // pred_check_branch
                %389 = sbr.rel (0) target = $region79
              $region78: #{tpu_custom_call.1} parent=63 // pred_region
                loop: start=0, step=1, limit=1
                $region80: #{tpu_custom_call.1} parent=78 // loop_pre_header
                  _
                $region81: #{tpu_custom_call.1} parent=78 // loop_header
                  %s391 = sphi 0, %s395
                  %p392 = scmp.ge.s32.totalorder %s391, 1
                  %s396 = sphi %s361, %s361
                  %s397 = sphi %s368, %s368
                $region82: #{tpu_custom_call.1} parent=78 // loop_header_branch
                  %394 = sbr.rel (%p392) target = $region86
                $region83: #{tpu_custom_call.1} parent=78 // loop_body
                  %v398 = vld [vmem:[%s396] sm:$0xff]
                  %399 = vst [vmem:[%s397] sm:$0xff] %v398
                  %v400 = vld [vmem:[%s396 + $0x8] sm:$0xff]
                  %401 = vst [vmem:[%s397 + $0x10] sm:$0xff] %v400
                $region84: #{tpu_custom_call.1} parent=78 // loop_footer
                  %s395 = sadd.s32 1, %s391
                $region85: #{tpu_custom_call.1} parent=78 // loop_footer_branch
                  %390 = sbr.rel target = $region81
                $region86: #{tpu_custom_call.1} parent=78 // loop_exit
                  _
              $region79: #{tpu_custom_call.1} parent=63 // pred_fallthru
                _
              // Predicated region
              $region87: #{tpu_custom_call.1} parent=63 // pred_check
                _
              $region88: #{tpu_custom_call.1} parent=63 // pred_check_branch
                %403 = sbr.rel target = $region90
              $region89: #{tpu_custom_call.1} parent=63 // pred_region
                _
              $region90: #{tpu_custom_call.1} parent=63 // pred_fallthru
                _
            $region64: #{tpu_custom_call.1} parent=59 // pred_fallthru
              _
            // Predicated region
            $region65: #{tpu_custom_call.1} parent=59 // pred_check
              _
            $region66: #{tpu_custom_call.1} parent=59 // pred_check_branch
              %374 = sbr.rel target = $region68
            $region67: #{tpu_custom_call.1} parent=59 // pred_region
              loop: start=0, step=1, limit=1
              $region69: #{tpu_custom_call.1} parent=67 // loop_pre_header
                _
              $region70: #{tpu_custom_call.1} parent=67 // loop_header
                %s377 = sphi 0, %s381
                %p378 = scmp.ge.s32.totalorder %s377, 1
                %s382 = sphi %s361, %s361
                %s383 = sphi %s368, %s368
              $region71: #{tpu_custom_call.1} parent=67 // loop_header_branch
                %380 = sbr.rel (%p378) target = $region75
              $region72: #{tpu_custom_call.1} parent=67 // loop_body
                %v384 = vld [vmem:[%s382] sm:$0xff]
                %385 = vst [vmem:[%s383] sm:$0xff] %v384
                %v386 = vld [vmem:[%s382 + $0x8] sm:$0xff]
                %387 = vst [vmem:[%s383 + $0x10] sm:$0xff] %v386
              $region73: #{tpu_custom_call.1} parent=67 // loop_footer
                %s381 = sadd.s32 1, %s377
              $region74: #{tpu_custom_call.1} parent=67 // loop_footer_branch
                %376 = sbr.rel target = $region70
              $region75: #{tpu_custom_call.1} parent=67 // loop_exit
                _
            $region68: #{tpu_custom_call.1} parent=59 // pred_fallthru
              _
          $region60: #{tpu_custom_call.1} parent=55 // pred_fallthru
            _
          %404 = vnop
        $region56: #{tpu_custom_call.1} parent=31 // pred_fallthru
          _
      $region32: #{tpu_custom_call.1} parent=5 // pred_fallthru
        _
      %p405 = scmp.le.s32.totalorder 2, %s15
      // Predicated region
      $region91: #{tpu_custom_call.1} parent=5 // pred_check
        %p406 = pneg %p405
      $region92: #{tpu_custom_call.1} parent=5 // pred_check_branch
        %408 = sbr.rel (%p406) target = $region94
      $region93: #{tpu_custom_call.1} parent=5 // pred_region
        %s409 = ssub.s32 %s15, 2
        // Predicated region
        $region95: #{tpu_custom_call.1} parent=93 // pred_check
          %p410 = pneg %p161
        $region96: #{tpu_custom_call.1} parent=93 // pred_check_branch
          %412 = sbr.rel (%p410) target = $region98
        $region97: #{tpu_custom_call.1} parent=93 // pred_region
          %s413 = sand.u32 %s146, 1
          %s414 = sand.u32 %s146, 1
          %s415 = smul.addr %s414, 16
          %s416 = scalar_lea.vmem [#allocation8], %s415
        $region98: #{tpu_custom_call.1} parent=93 // pred_fallthru
          _
      $region94: #{tpu_custom_call.1} parent=5 // pred_fallthru
        _
    $region6: #{tpu_custom_call.1} parent=1 // loop_footer
      %s19 = sadd.s32 1, %s15
    $region7: #{tpu_custom_call.1} parent=1 // loop_footer_branch
      %14 = sbr.rel target = $region3
    $region8: #{tpu_custom_call.1} parent=1 // loop_exit
      _
    %417 = vsyncpa [#allocation4], 1
    %s418 = scalar_lea.sflag [#allocation4], 1
    %419 = vsyncpa %s418, 1
    %420 = vsyncpa [#allocation6], 1
    %s421 = scalar_lea.sflag [#allocation6], 1
    %422 = vsyncpa %s421, 1

</llo_original>
